<compile_context>
chip_gen: v5e
topology: v5e:2x2
jax: 0.10.0
libtpu: 0.0.40
codegen_flags: <defaults>
</compile_context>

<pallas_src>
import functools

import jax
import jax.numpy as jnp
from jax.experimental import pallas as pl
from jax.experimental.pallas import tpu as pltpu

_LANES = 128
_SUBLANES = 8
_NUM_CORE_SPLITS = 2                      # leading "parallel" grid axis (v7x megacore)
_VMEM_TILE_BUDGET = 12 * 1024 * 1024      # bytes for all double-buffered input tiles
_VMEM_LIMIT_BYTES = 32 * 1024 * 1024      # safe on v5e/v6e (128 MiB) and v7x (64 MiB)


def _round_up(x, m):
    return ((x + m - 1) // m) * m


def _make_loss_kernel(s):
    s = float(s)

    def kernel(t_ref, lo_ref, up_ref, out_ref, c_acc, w_acc, soft_acc):
        i = pl.program_id(1)

        @pl.when(i == 0)
        def _init():
            c_acc[...] = jnp.zeros_like(c_acc)
            w_acc[...] = jnp.zeros_like(w_acc)
            soft_acc[...] = jnp.zeros_like(soft_acc)

        t = t_ref[...].astype(jnp.float32)        # (tm, 128)
        lo = lo_ref[...].astype(jnp.float32)
        up = up_ref[...].astype(jnp.float32)

        # Hard coverage indicator and captured interval width.
        k_hard = jnp.logical_and(t >= lo, up >= t).astype(jnp.float32)
        width = (up - lo) * k_hard

        # Soft coverage: sigmoid(s*(t-lo)) * sigmoid(s*(up-t))
        #             = 1 / ((1 + exp(-s*(t-lo))) * (1 + exp(-s*(up-t)))).
        # exp arguments are clamped at 40 so the denominator stays finite (the
        # clamp only touches elements whose true k_soft < 1e-17); one Newton step
        # on top of the approximate reciprocal restores full f32 precision.
        ea = jnp.exp(jnp.minimum(-s * (t - lo), 40.0))
        eb = jnp.exp(jnp.minimum(-s * (up - t), 40.0))
        denom = (1.0 + ea) * (1.0 + eb)
        r = pl.reciprocal(denom, approx=True)
        k_soft = r * (2.0 - denom * r)

        # Reduce only across vreg groups (pure VPU adds into (8,128) accumulators).
        g = t.shape[0] // _SUBLANES
        c_acc[...] += jnp.sum(k_hard.reshape(g, _SUBLANES, _LANES), axis=0)
        w_acc[...] += jnp.sum(width.reshape(g, _SUBLANES, _LANES), axis=0)
        soft_acc[...] += jnp.sum(k_soft.reshape(g, _SUBLANES, _LANES), axis=0)

        @pl.when(i == pl.num_programs(1) - 1)
        def _finalize():
            out_ref[0, 0] = c_acc[...]
            out_ref[0, 1] = w_acc[...]
            out_ref[0, 2] = soft_acc[...]

    return kernel


@functools.partial(jax.jit, static_argnames=("lmd", "alpha", "s"))
def my_loss(pred, truth, lmd=0.3, alpha=0.05, s=50.0):
    """pred: (..., 2H), truth: (..., H). Returns scalar loss (float32)."""
    if not jnp.issubdtype(truth.dtype, jnp.floating):
        truth = truth.astype(jnp.float32)
    if not jnp.issubdtype(pred.dtype, jnp.floating):
        pred = pred.astype(jnp.float32)

    target = truth.reshape(-1, truth.shape[-1])
    bound = pred.reshape(-1, pred.shape[-1])
    M, H = target.shape
    assert bound.shape == (M, 2 * H), (bound.shape, (M, 2 * H))
    N = M * H

    # Lane-dense repack: elementwise ops + global sums are layout-invariant.
    # Padding: target = -inf, lower = upper = 0  =>  K = 0, width = 0, k_soft ~ 0.
    t_flat = target.reshape(-1)
    lo_flat = bound[:, :H].reshape(-1)
    up_flat = bound[:, H:].reshape(-1)

    # Row-tile size from a VMEM byte budget (3 arrays x 2 pipeline buffers).
    row_bytes = 2 * _LANES * (t_flat.dtype.itemsize
                              + lo_flat.dtype.itemsize
                              + up_flat.dtype.itemsize)
    tm = max(_SUBLANES, (_VMEM_TILE_BUDGET // row_bytes) // _SUBLANES * _SUBLANES)

    r0 = pl.cdiv(N, _LANES)
    # Don't use tiles much bigger than the data.
    tm = min(tm, _round_up(pl.cdiv(r0, _NUM_CORE_SPLITS), _SUBLANES))
    rows = _round_up(max(r0, 1), _NUM_CORE_SPLITS * tm)
    n_inner = rows // (_NUM_CORE_SPLITS * tm)
    pad = rows * _LANES - N

    t_p = jnp.pad(t_flat, (0, pad), constant_values=-jnp.inf).reshape(rows, _LANES)
    lo_p = jnp.pad(lo_flat, (0, pad)).reshape(rows, _LANES)
    up_p = jnp.pad(up_flat, (0, pad)).reshape(rows, _LANES)

    in_spec = pl.BlockSpec((tm, _LANES), lambda c, i: (c * n_inner + i, 0))
    out_spec = pl.BlockSpec((1, 3, _SUBLANES, _LANES), lambda c, i: (c, 0, 0, 0))

    cost = pl.CostEstimate(
        flops=24 * N,
        transcendentals=3 * N,
        bytes_accessed=(t_p.size * t_p.dtype.itemsize
                        + lo_p.size * lo_p.dtype.itemsize
                        + up_p.size * up_p.dtype.itemsize
                        + _NUM_CORE_SPLITS * 3 * _SUBLANES * _LANES * 4),
    )

    partials = pl.pallas_call(
        _make_loss_kernel(s),
        out_shape=jax.ShapeDtypeStruct(
            (_NUM_CORE_SPLITS, 3, _SUBLANES, _LANES), jnp.float32),
        grid_spec=pltpu.PrefetchScalarGridSpec(
            num_scalar_prefetch=0,
            grid=(_NUM_CORE_SPLITS, n_inner),
            in_specs=[in_spec, in_spec, in_spec],
            out_specs=out_spec,
            scratch_shapes=[pltpu.VMEM((_SUBLANES, _LANES), jnp.float32)] * 3,
        ),
        compiler_params=pltpu.CompilerParams(
            dimension_semantics=("parallel", "arbitrary"),
            vmem_limit_bytes=_VMEM_LIMIT_BYTES,
        ),
        cost_estimate=cost,
    )(t_p, lo_p, up_p)

    sums = jnp.sum(partials, axis=(0, 2, 3))          # (3,)
    C = sums[0]
    mpiw_capt = sums[1] / C        # NaN if nothing is covered — matches PyTorch ref
    picp_soft = sums[2] / N
    gap = 1.0 - alpha - picp_soft
    penalty = lmd * N * gap * gap / alpha / (1.0 - alpha)
    return jnp.where(gap > 0, mpiw_capt + penalty, mpiw_capt)


def my_loss_ref(pred, truth, lmd=0.3, alpha=0.05, s=50.0):
    """Pure-JAX reference mirroring the PyTorch forward."""
    target = truth.reshape(-1, truth.shape[-1]).astype(jnp.float32)
    bound = pred.reshape(-1, pred.shape[-1]).astype(jnp.float32)
    M, H = target.shape
    N = M * H
    lower, upper = bound[:, :H], bound[:, H:]
    K = ((target >= lower) & (upper >= target)).astype(jnp.float32)
    C = jnp.sum(K)
    mpiw_capt = jnp.sum((upper - lower) * K) / C
    k_soft = jax.nn.sigmoid(s * (target - lower)) * jax.nn.sigmoid(s * (upper - target))
    picp_soft = jnp.sum(k_soft) / N
    gap = 1.0 - alpha - picp_soft
    return jnp.where(gap > 0,
                     mpiw_capt + lmd * N * gap * gap / alpha / (1.0 - alpha),
                     mpiw_capt)


if __name__ == "__main__":
    key = jax.random.PRNGKey(0)
    k1, k2, k3, k4 = jax.random.split(key, 4)

    # Case 1: shapes implied by the module docstring, f32, H not a multiple of 128.
    B, D, H = 2, 8, 16
    truth = jax.random.normal(k1, (B, D, H), dtype=jnp.float32)
    pred = jax.random.normal(k2, (B, D, 2 * H), dtype=jnp.float32)
    out = jax.block_until_ready(my_loss(pred, truth))
    ref = jax.block_until_ready(my_loss_ref(pred, truth))
    assert jnp.isfinite(out), "loss is not finite"
    assert jnp.allclose(out, ref, rtol=1e-4, atol=1e-4), (out, ref)

    # Case 2: bf16 inputs stay bf16 through HBM (kernel upcasts on the VPU).
    B2, D2, H2 = 4, 8, 48
    truth2 = jax.random.normal(k3, (B2, D2, H2), dtype=jnp.bfloat16)
    pred2 = jax.random.normal(k4, (B2, D2, 2 * H2), dtype=jnp.bfloat16)
    out2 = jax.block_until_ready(my_loss(pred2, truth2))
    ref2 = jax.block_until_ready(my_loss_ref(pred2, truth2))
    assert jnp.isfinite(out2), "bf16 loss is not finite"
    assert jnp.allclose(out2, ref2, rtol=1e-4, atol=1e-4), (out2, ref2)

    print("KERNEL_OK")
</pallas_src>

<mosaic_0001>
module attributes {stable_mosaic.version = 11 : i64} {
  func.func @kernel(%arg0: i32, %arg1: i32, %arg2: memref<8x128xf32, #tpu.memory_space<vmem>>, %arg3: memref<8x128xf32, #tpu.memory_space<vmem>>, %arg4: memref<8x128xf32, #tpu.memory_space<vmem>>, %arg5: memref<1x3x8x128xf32, #tpu.memory_space<vmem>>, %arg6: memref<8x128xf32, #tpu.memory_space<vmem>>, %arg7: memref<8x128xf32, #tpu.memory_space<vmem>>, %arg8: memref<8x128xf32, #tpu.memory_space<vmem>>) attributes {dimension_semantics = [#tpu.dimension_semantics<parallel>, #tpu.dimension_semantics<arbitrary>], iteration_bounds = array<i64: 2, 1>, scalar_prefetch = 0 : i64, scratch_operands = 3 : i64, tpu.core_type = #tpu.core_type<tc>, window_params = [{transform_indices = @transform_0, window_bounds = array<i64: 8, 128>}, {transform_indices = @transform_1, window_bounds = array<i64: 8, 128>}, {transform_indices = @transform_2, window_bounds = array<i64: 8, 128>}, {transform_indices = @transform_3, window_bounds = array<i64: 1, 3, 8, 128>}]} {
    %c0_i32 = arith.constant 0 : i32
    %0 = arith.cmpi eq, %arg1, %c0_i32 : i32
    %1 = arith.extui %0 : i1 to i32
    %c0_i32_0 = arith.constant 0 : i32
    %2 = arith.cmpi ne, %1, %c0_i32_0 : i32
    scf.if %2 {
      %cst_29 = arith.constant 0.000000e+00 : f32
      %53 = vector.broadcast %cst_29 : f32 to vector<8x128xf32>
      %c0_30 = arith.constant 0 : index
      %c0_31 = arith.constant 0 : index
      %54 = vector.load %arg6[%c0_30, %c0_31] : memref<8x128xf32, #tpu.memory_space<vmem>>, vector<8x128xf32>
      tpu.vector_store %arg6[%c0_30, %c0_31], %53 {strides = array<i32>} : memref<8x128xf32, #tpu.memory_space<vmem>>, vector<8x128xf32>,
      %cst_32 = arith.constant 0.000000e+00 : f32
      %55 = vector.broadcast %cst_32 : f32 to vector<8x128xf32>
      %c0_33 = arith.constant 0 : index
      %c0_34 = arith.constant 0 : index
      %56 = vector.load %arg7[%c0_33, %c0_34] : memref<8x128xf32, #tpu.memory_space<vmem>>, vector<8x128xf32>
      tpu.vector_store %arg7[%c0_33, %c0_34], %55 {strides = array<i32>} : memref<8x128xf32, #tpu.memory_space<vmem>>, vector<8x128xf32>,
      %cst_35 = arith.constant 0.000000e+00 : f32
      %57 = vector.broadcast %cst_35 : f32 to vector<8x128xf32>
      %c0_36 = arith.constant 0 : index
      %c0_37 = arith.constant 0 : index
      %58 = vector.load %arg8[%c0_36, %c0_37] : memref<8x128xf32, #tpu.memory_space<vmem>>, vector<8x128xf32>
      tpu.vector_store %arg8[%c0_36, %c0_37], %57 {strides = array<i32>} : memref<8x128xf32, #tpu.memory_space<vmem>>, vector<8x128xf32>,
    } else {
    }
    %c0 = arith.constant 0 : index
    %c0_1 = arith.constant 0 : index
    %3 = vector.load %arg2[%c0, %c0_1] : memref<8x128xf32, #tpu.memory_space<vmem>>, vector<8x128xf32>
    %c0_2 = arith.constant 0 : index
    %c0_3 = arith.constant 0 : index
    %4 = vector.load %arg3[%c0_2, %c0_3] : memref<8x128xf32, #tpu.memory_space<vmem>>, vector<8x128xf32>
    %c0_4 = arith.constant 0 : index
    %c0_5 = arith.constant 0 : index
    %5 = vector.load %arg4[%c0_4, %c0_5] : memref<8x128xf32, #tpu.memory_space<vmem>>, vector<8x128xf32>
    %6 = arith.cmpf oge, %3, %4 : vector<8x128xf32>
    %7 = arith.cmpf oge, %5, %3 : vector<8x128xf32>
    %8 = arith.andi %6, %7 : vector<8x128xi1>
    %9 = arith.extui %8 : vector<8x128xi1> to vector<8x128xi32>
    %10 = arith.sitofp %9 : vector<8x128xi32> to vector<8x128xf32>
    %11 = arith.subf %5, %4 : vector<8x128xf32>
    %12 = arith.mulf %11, %10 : vector<8x128xf32>
    %13 = arith.subf %3, %4 : vector<8x128xf32>
    %cst = arith.constant -5.000000e+01 : f32
    %14 = vector.broadcast %cst : f32 to vector<8x128xf32>
    %15 = arith.mulf %14, %13 : vector<8x128xf32>
    %cst_6 = arith.constant 4.000000e+01 : f32
    %16 = vector.broadcast %cst_6 : f32 to vector<8x128xf32>
    %17 = arith.minimumf %15, %16 : vector<8x128xf32>
    %18 = math.exp %17 : vector<8x128xf32>
    %19 = arith.subf %5, %3 : vector<8x128xf32>
    %cst_7 = arith.constant -5.000000e+01 : f32
    %20 = vector.broadcast %cst_7 : f32 to vector<8x128xf32>
    %21 = arith.mulf %20, %19 : vector<8x128xf32>
    %cst_8 = arith.constant 4.000000e+01 : f32
    %22 = vector.broadcast %cst_8 : f32 to vector<8x128xf32>
    %23 = arith.minimumf %21, %22 : vector<8x128xf32>
    %24 = math.exp %23 : vector<8x128xf32>
    %cst_9 = arith.constant 1.000000e+00 : f32
    %25 = vector.broadcast %cst_9 : f32 to vector<8x128xf32>
    %26 = arith.addf %25, %18 : vector<8x128xf32>
    %cst_10 = arith.constant 1.000000e+00 : f32
    %27 = vector.broadcast %cst_10 : f32 to vector<8x128xf32>
    %28 = arith.addf %27, %24 : vector<8x128xf32>
    %29 = arith.mulf %26, %28 : vector<8x128xf32>
    %30 = tpu.reciprocal %29 {approx = true} : vector<8x128xf32> -> vector<8x128xf32>
    %31 = arith.mulf %29, %30 : vector<8x128xf32>
    %cst_11 = arith.constant 2.000000e+00 : f32
    %32 = vector.broadcast %cst_11 : f32 to vector<8x128xf32>
    %33 = arith.subf %32, %31 : vector<8x128xf32>
    %34 = arith.mulf %30, %33 : vector<8x128xf32>
    %c0_12 = arith.constant 0 : index
    %c0_13 = arith.constant 0 : index
    %35 = vector.load %arg6[%c0_12, %c0_13] : memref<8x128xf32, #tpu.memory_space<vmem>>, vector<8x128xf32>
    %36 = vector.shape_cast %10 : vector<8x128xf32> to vector<1x8x128xf32>
    %cst_14 = arith.constant dense<0.000000e+00> : vector<8x128xf32>
    %37 = vector.multi_reduction <add>, %36, %cst_14 [0] : vector<1x8x128xf32> to vector<8x128xf32>
    %38 = arith.addf %35, %37 : vector<8x128xf32>
    %c0_15 = arith.constant 0 : index
    %c0_16 = arith.constant 0 : index
    %39 = vector.load %arg6[%c0_15, %c0_16] : memref<8x128xf32, #tpu.memory_space<vmem>>, vector<8x128xf32>
    tpu.vector_store %arg6[%c0_15, %c0_16], %38 {strides = array<i32>} : memref<8x128xf32, #tpu.memory_space<vmem>>, vector<8x128xf32>,
    %c0_17 = arith.constant 0 : index
    %c0_18 = arith.constant 0 : index
    %40 = vector.load %arg7[%c0_17, %c0_18] : memref<8x128xf32, #tpu.memory_space<vmem>>, vector<8x128xf32>
    %41 = vector.shape_cast %12 : vector<8x128xf32> to vector<1x8x128xf32>
    %cst_19 = arith.constant dense<0.000000e+00> : vector<8x128xf32>
    %42 = vector.multi_reduction <add>, %41, %cst_19 [0] : vector<1x8x128xf32> to vector<8x128xf32>
    %43 = arith.addf %40, %42 : vector<8x128xf32>
    %c0_20 = arith.constant 0 : index
    %c0_21 = arith.constant 0 : index
    %44 = vector.load %arg7[%c0_20, %c0_21] : memref<8x128xf32, #tpu.memory_space<vmem>>, vector<8x128xf32>
    tpu.vector_store %arg7[%c0_20, %c0_21], %43 {strides = array<i32>} : memref<8x128xf32, #tpu.memory_space<vmem>>, vector<8x128xf32>,
    %c0_22 = arith.constant 0 : index
    %c0_23 = arith.constant 0 : index
    %45 = vector.load %arg8[%c0_22, %c0_23] : memref<8x128xf32, #tpu.memory_space<vmem>>, vector<8x128xf32>
    %46 = vector.shape_cast %34 : vector<8x128xf32> to vector<1x8x128xf32>
    %cst_24 = arith.constant dense<0.000000e+00> : vector<8x128xf32>
    %47 = vector.multi_reduction <add>, %46, %cst_24 [0] : vector<1x8x128xf32> to vector<8x128xf32>
    %48 = arith.addf %45, %47 : vector<8x128xf32>
    %c0_25 = arith.constant 0 : index
    %c0_26 = arith.constant 0 : index
    %49 = vector.load %arg8[%c0_25, %c0_26] : memref<8x128xf32, #tpu.memory_space<vmem>>, vector<8x128xf32>
    tpu.vector_store %arg8[%c0_25, %c0_26], %48 {strides = array<i32>} : memref<8x128xf32, #tpu.memory_space<vmem>>, vector<8x128xf32>,
    %c0_i32_27 = arith.constant 0 : i32
    %50 = arith.cmpi eq, %arg1, %c0_i32_27 : i32
    %51 = arith.extui %50 : i1 to i32
    %c0_i32_28 = arith.constant 0 : i32
    %52 = arith.cmpi ne, %51, %c0_i32_28 : i32
    scf.if %52 {
      %c0_29 = arith.constant 0 : index
      %c0_30 = arith.constant 0 : index
      %53 = vector.load %arg6[%c0_29, %c0_30] : memref<8x128xf32, #tpu.memory_space<vmem>>, vector<8x128xf32>
      %c0_31 = arith.constant 0 : index
      %c0_32 = arith.constant 0 : index
      %c0_33 = arith.constant 0 : index
      %c0_34 = arith.constant 0 : index
      %54 = vector.load %arg5[%c0_31, %c0_32, %c0_33, %c0_34] : memref<1x3x8x128xf32, #tpu.memory_space<vmem>>, vector<1x1x8x128xf32>
      %55 = vector.shape_cast %54 : vector<1x1x8x128xf32> to vector<8x128xf32>
      %56 = vector.shape_cast %53 : vector<8x128xf32> to vector<1x1x8x128xf32>
      tpu.vector_store %arg5[%c0_31, %c0_32, %c0_33, %c0_34], %56 {strides = array<i32>} : memref<1x3x8x128xf32, #tpu.memory_space<vmem>>, vector<1x1x8x128xf32>,
      %c0_35 = arith.constant 0 : index
      %c0_36 = arith.constant 0 : index
      %57 = vector.load %arg7[%c0_35, %c0_36] : memref<8x128xf32, #tpu.memory_space<vmem>>, vector<8x128xf32>
      %c0_37 = arith.constant 0 : index
      %c1 = arith.constant 1 : index
      %c0_38 = arith.constant 0 : index
      %c0_39 = arith.constant 0 : index
      %58 = vector.load %arg5[%c0_37, %c1, %c0_38, %c0_39] : memref<1x3x8x128xf32, #tpu.memory_space<vmem>>, vector<1x1x8x128xf32>
      %59 = vector.shape_cast %58 : vector<1x1x8x128xf32> to vector<8x128xf32>
      %60 = vector.shape_cast %57 : vector<8x128xf32> to vector<1x1x8x128xf32>
      tpu.vector_store %arg5[%c0_37, %c1, %c0_38, %c0_39], %60 {strides = array<i32>} : memref<1x3x8x128xf32, #tpu.memory_space<vmem>>, vector<1x1x8x128xf32>,
      %c0_40 = arith.constant 0 : index
      %c0_41 = arith.constant 0 : index
      %61 = vector.load %arg8[%c0_40, %c0_41] : memref<8x128xf32, #tpu.memory_space<vmem>>, vector<8x128xf32>
      %c0_42 = arith.constant 0 : index
      %c2 = arith.constant 2 : index
      %c0_43 = arith.constant 0 : index
      %c0_44 = arith.constant 0 : index
      %62 = vector.load %arg5[%c0_42, %c2, %c0_43, %c0_44] : memref<1x3x8x128xf32, #tpu.memory_space<vmem>>, vector<1x1x8x128xf32>
      %63 = vector.shape_cast %62 : vector<1x1x8x128xf32> to vector<8x128xf32>
      %64 = vector.shape_cast %61 : vector<8x128xf32> to vector<1x1x8x128xf32>
      tpu.vector_store %arg5[%c0_42, %c2, %c0_43, %c0_44], %64 {strides = array<i32>} : memref<1x3x8x128xf32, #tpu.memory_space<vmem>>, vector<1x1x8x128xf32>,
    } else {
    }
    return
  }
  func.func @transform_0(%arg0: i32, %arg1: i32) -> (i32, i32) {
    %c1_i32 = arith.constant 1 : i32
    %0 = arith.muli %arg0, %c1_i32 : i32
    %1 = arith.addi %0, %arg1 : i32
    %c0_i32 = arith.constant 0 : i32
    %c0_i32_0 = arith.constant 0 : i32
    return %1, %c0_i32 : i32, i32
  }
  func.func @transform_1(%arg0: i32, %arg1: i32) -> (i32, i32) {
    %c1_i32 = arith.constant 1 : i32
    %0 = arith.muli %arg0, %c1_i32 : i32
    %1 = arith.addi %0, %arg1 : i32
    %c0_i32 = arith.constant 0 : i32
    %c0_i32_0 = arith.constant 0 : i32
    return %1, %c0_i32 : i32, i32
  }
  func.func @transform_2(%arg0: i32, %arg1: i32) -> (i32, i32) {
    %c1_i32 = arith.constant 1 : i32
    %0 = arith.muli %arg0, %c1_i32 : i32
    %1 = arith.addi %0, %arg1 : i32
    %c0_i32 = arith.constant 0 : i32
    %c0_i32_0 = arith.constant 0 : i32
    return %1, %c0_i32 : i32, i32
  }
  func.func @transform_3(%arg0: i32, %arg1: i32) -> (i32, i32, i32, i32) {
    %c0_i32 = arith.constant 0 : i32
    %c0_i32_0 = arith.constant 0 : i32
    %c0_i32_1 = arith.constant 0 : i32
    %c0_i32_2 = arith.constant 0 : i32
    return %arg0, %c0_i32, %c0_i32_0, %c0_i32_1 : i32, i32, i32, i32
  }
}

</mosaic_0001>

<llo_original>
// kernel: my_loss.1
$region0: #{my_loss.1}
  #allocation0 [shape = 'u32[]', space=smem, size = 0x4, offset = 0x4, fixed_abs, tag = 'smem constant byte address 0x4 - core index']
  #allocation1 [shape = 'u32[72,128]{1,0:T(1,128)}', space=vmem, size = 0x9000, scoped, tag = 'internal scratch']
  #allocation2 [shape = 'f32[8,128]{1,0:T(8,128)}', space=vmem, size = 0x1000, scoped, tag = 'scratch operand']
  #allocation3 [shape = 'f32[8,128]{1,0:T(8,128)}', space=vmem, size = 0x1000, scoped, tag = 'scratch operand']
  #allocation4 [shape = 'f32[8,128]{1,0:T(8,128)}', space=vmem, size = 0x1000, scoped, tag = 'scratch operand']
  %s0 = inlined_call_operand.vmem [shape: f32[16,128], index: 0, kind: input, shape index: {}]
  %s1 = inlined_call_operand.vmem [shape: f32[16,128], index: 1, kind: input, shape index: {}]
  %s2 = inlined_call_operand.vmem [shape: f32[16,128], index: 2, kind: input, shape index: {}]
  %s3 = inlined_call_operand.vmem [shape: f32[2,3,8,128], index: 3, kind: output, shape index: {}]
  %s4 = sld [smem:[#allocation0]]
  $region53: #{my_loss.1} parent=0
    _
  %s6 = ssub.s32 1, %s4
  %s7 = scalar_select 0, %s6, %s4
  loop: start=0, step=1, limit=4
  $region2: #{my_loss.1} parent=0 // loop_pre_header
    _
  $region3: #{my_loss.1} parent=0 // loop_header
    %s9 = sphi 0, %s13
    %p10 = scmp.ge.s32.totalorder %s9, 4
    %s16 = sphi 0, %s28
    %s17 = sphi 0, %s24
    %s18 = sphi 0, %s16
    %s19 = sphi 0, %s17
    %s20 = sphi 0, %s18
    %s21 = sphi 0, %s19
    %s33 = sphi 0, %s35
    %s36 = sphi 0, %s33
    %s37 = sphi 0, %s36
    %s53 = sphi 0, %s37
    %s61 = sphi 0, %s63
    %s64 = sphi 0, %s61
    %s65 = sphi 0, %s64
    %s81 = sphi 0, %s65
    %s89 = sphi 0, %s91
    %s92 = sphi 0, %s89
    %s93 = sphi 0, %s92
    %s109 = sphi 0, %s93
    %s115 = sphi 0, %s117
    %s118 = sphi 0, %s115
    %s119 = sphi 0, %s118
    %s135 = sphi 0, %s119
  $region4: #{my_loss.1} parent=0 // loop_header_branch
    %12 = sbr.rel (%p10) target = $region8
  $region5: #{my_loss.1} parent=0 // loop_body
    %s14 = ssub.s32 %s9, 1
    %s15 = ssub.s32 %s9, 2
    %s22 = sadd.s32 1, %s17
    %p23 = scmp.ge.s32.totalorder %s22, 1
    %s24 = scalar_select %p23, 0, %s22
    %s25 = sadd.s32 1, %s16
    %s26 = scalar_select %p23, %s25, %s16
    %p27 = scmp.ge.s32.totalorder %s26, 2
    %s28 = scalar_select %p27, 0, %s26
    %s29 = sadd.s32 %s16, %s17
    %s30 = sadd.s32 %s28, %s24
    %s31 = ssub.s32 %s29, %s30
    %p32 = scmp.eq.s32.totalorder %s31, 0
    %s34 = sadd.s32 %s33, 1
    %s35 = scalar_select %p32, %s33, %s34
    %p38 = pneg %p32
    %p39 = scmp.eq.s32.totalorder %s9, 1
    %p40 = por %p38, %p39
    %p41 = scmp.ne.s32.totalorder %s33, %s36
    %p42 = scmp.eq.s32.totalorder %s9, 0
    %p43 = por %p41, %p42
    %p44 = scmp.ne.s32.totalorder %s33, %s36
    %p45 = scmp.eq.s32.totalorder %s14, 1
    %p46 = por %p44, %p45
    %p47 = scmp.ne.s32.totalorder %s36, %s37
    %p48 = scmp.eq.s32.totalorder %s14, 0
    %p49 = por %p47, %p48
    %p50 = scmp.ne.s32.totalorder %s36, %s37
    %p51 = scmp.eq.s32.totalorder %s15, 1
    %p52 = por %p50, %p51
    %p54 = scmp.ne.s32.totalorder %s37, %s53
    %p55 = scmp.eq.s32.totalorder %s15, 0
    %p56 = por %p54, %p55
    %s57 = sadd.s32 %s16, %s17
    %s58 = sadd.s32 %s28, %s24
    %s59 = ssub.s32 %s57, %s58
    %p60 = scmp.eq.s32.totalorder %s59, 0
    %s62 = sadd.s32 %s61, 1
    %s63 = scalar_select %p60, %s61, %s62
    %p66 = pneg %p60
    %p67 = scmp.eq.s32.totalorder %s9, 1
    %p68 = por %p66, %p67
    %p69 = scmp.ne.s32.totalorder %s61, %s64
    %p70 = scmp.eq.s32.totalorder %s9, 0
    %p71 = por %p69, %p70
    %p72 = scmp.ne.s32.totalorder %s61, %s64
    %p73 = scmp.eq.s32.totalorder %s14, 1
    %p74 = por %p72, %p73
    %p75 = scmp.ne.s32.totalorder %s64, %s65
    %p76 = scmp.eq.s32.totalorder %s14, 0
    %p77 = por %p75, %p76
    %p78 = scmp.ne.s32.totalorder %s64, %s65
    %p79 = scmp.eq.s32.totalorder %s15, 1
    %p80 = por %p78, %p79
    %p82 = scmp.ne.s32.totalorder %s65, %s81
    %p83 = scmp.eq.s32.totalorder %s15, 0
    %p84 = por %p82, %p83
    %s85 = sadd.s32 %s16, %s17
    %s86 = sadd.s32 %s28, %s24
    %s87 = ssub.s32 %s85, %s86
    %p88 = scmp.eq.s32.totalorder %s87, 0
    %s90 = sadd.s32 %s89, 1
    %s91 = scalar_select %p88, %s89, %s90
    %p94 = pneg %p88
    %p95 = scmp.eq.s32.totalorder %s9, 1
    %p96 = por %p94, %p95
    %p97 = scmp.ne.s32.totalorder %s89, %s92
    %p98 = scmp.eq.s32.totalorder %s9, 0
    %p99 = por %p97, %p98
    %p100 = scmp.ne.s32.totalorder %s89, %s92
    %p101 = scmp.eq.s32.totalorder %s14, 1
    %p102 = por %p100, %p101
    %p103 = scmp.ne.s32.totalorder %s92, %s93
    %p104 = scmp.eq.s32.totalorder %s14, 0
    %p105 = por %p103, %p104
    %p106 = scmp.ne.s32.totalorder %s92, %s93
    %p107 = scmp.eq.s32.totalorder %s15, 1
    %p108 = por %p106, %p107
    %p110 = scmp.ne.s32.totalorder %s93, %s109
    %p111 = scmp.eq.s32.totalorder %s15, 0
    %p112 = por %p110, %p111
    %s113 = ssub.s32 %s16, %s28
    %p114 = scmp.eq.s32.totalorder %s113, 0
    %s116 = sadd.s32 %s115, 1
    %s117 = scalar_select %p114, %s115, %s116
    %p120 = pneg %p114
    %p121 = scmp.eq.s32.totalorder %s9, 1
    %p122 = por %p120, %p121
    %p123 = scmp.ne.s32.totalorder %s115, %s118
    %p124 = scmp.eq.s32.totalorder %s9, 0
    %p125 = por %p123, %p124
    %p126 = scmp.ne.s32.totalorder %s115, %s118
    %p127 = scmp.eq.s32.totalorder %s14, 1
    %p128 = por %p126, %p127
    %p129 = scmp.ne.s32.totalorder %s118, %s119
    %p130 = scmp.eq.s32.totalorder %s14, 0
    %p131 = por %p129, %p130
    %p132 = scmp.ne.s32.totalorder %s118, %s119
    %p133 = scmp.eq.s32.totalorder %s15, 1
    %p134 = por %p132, %p133
    %p136 = scmp.ne.s32.totalorder %s119, %s135
    %p137 = scmp.eq.s32.totalorder %s15, 0
    %p138 = por %p136, %p137
    %p139 = scmp.le.s32.totalorder 1, %s9
    %p140 = scmp.lt.s32.totalorder %s9, 3
    %p141 = pnand %p139, %p140
    %p142 = pneg %p141
    // Predicated region
    $region9: #{my_loss.1} parent=5 // pred_check
      _
    $region10: #{my_loss.1} parent=5 // pred_check_branch
      %144 = sbr.rel (%p141) target = $region12
    $region11: #{my_loss.1} parent=5 // pred_region
      %s145 = ssub.s32 %s9, 1
    $region12: #{my_loss.1} parent=5 // pred_fallthru
      _
    %p146 = scmp.lt.s32.totalorder %s9, 2
    // Predicated region
    $region13: #{my_loss.1} parent=5 // pred_check
      %p147 = pneg %p146
    $region14: #{my_loss.1} parent=5 // pred_check_branch
      %149 = sbr.rel (%p147) target = $region16
    $region15: #{my_loss.1} parent=5 // pred_region
      // Predicated region
      $region17: #{my_loss.1} parent=15 // pred_check
        %p150 = pneg %p43
      $region18: #{my_loss.1} parent=15 // pred_check_branch
        %152 = sbr.rel (%p150) target = $region20
      $region19: #{my_loss.1} parent=15 // pred_region
        %s153 = sadd.s32 %s16, %s17
        %p154 = scmp.lt.s32.totalorder %s153, 1
        %s155 = scalar_select %p154, %s153, 1
        %s156 = smul.addr %s155, 8
        %s157 = scalar_lea.vmem %s0, %s156
        %s158 = sadd.s32 %s16, %s17
      $region20: #{my_loss.1} parent=15 // pred_fallthru
        _
      // Predicated region
      $region21: #{my_loss.1} parent=15 // pred_check
        %p159 = pneg %p71
      $region22: #{my_loss.1} parent=15 // pred_check_branch
        %161 = sbr.rel (%p159) target = $region24
      $region23: #{my_loss.1} parent=15 // pred_region
        %s162 = sadd.s32 %s16, %s17
        %p163 = scmp.lt.s32.totalorder %s162, 1
        %s164 = scalar_select %p163, %s162, 1
        %s165 = smul.addr %s164, 8
        %s166 = scalar_lea.vmem %s1, %s165
        %s167 = sadd.s32 %s16, %s17
      $region24: #{my_loss.1} parent=15 // pred_fallthru
        _
      // Predicated region
      $region25: #{my_loss.1} parent=15 // pred_check
        %p168 = pneg %p99
      $region26: #{my_loss.1} parent=15 // pred_check_branch
        %170 = sbr.rel (%p168) target = $region28
      $region27: #{my_loss.1} parent=15 // pred_region
        %s171 = sadd.s32 %s16, %s17
        %p172 = scmp.lt.s32.totalorder %s171, 1
        %s173 = scalar_select %p172, %s171, 1
        %s174 = smul.addr %s173, 8
        %s175 = scalar_lea.vmem %s2, %s174
        %s176 = sadd.s32 %s16, %s17
      $region28: #{my_loss.1} parent=15 // pred_fallthru
        _
    $region16: #{my_loss.1} parent=5 // pred_fallthru
      _
    %p177 = scmp.le.s32.totalorder 1, %s9
    %p178 = scmp.lt.s32.totalorder %s9, 3
    %p179 = pnand %p177, %p178
    %p180 = pneg %p179
    // Predicated region
    $region29: #{my_loss.1} parent=5 // pred_check
      _
    $region30: #{my_loss.1} parent=5 // pred_check_branch
      %182 = sbr.rel (%p179) target = $region32
    $region31: #{my_loss.1} parent=5 // pred_region
      %s183 = ssub.s32 %s9, 1
      %s184 = sadd.s32 %s18, %s19
      %p185 = scmp.lt.s32.totalorder %s184, 1
      %s186 = scalar_select %p185, %s184, 1
      %s187 = smul.addr %s186, 8
      %s188 = scalar_lea.vmem %s0, %s187
      %p189 = pneg %p49
      %p190 = pneg %p46
      %s191 = sadd.s32 %s18, %s19
      %p192 = scmp.lt.s32.totalorder %s191, 1
      %s193 = scalar_select %p192, %s191, 1
      %s194 = smul.addr %s193, 8
      %s195 = scalar_lea.vmem %s1, %s194
      %p196 = pneg %p77
      %p197 = pneg %p74
      %s198 = sadd.s32 %s18, %s19
      %p199 = scmp.lt.s32.totalorder %s198, 1
      %s200 = scalar_select %p199, %s198, 1
      %s201 = smul.addr %s200, 8
      %s202 = scalar_lea.vmem %s2, %s201
      %p203 = pneg %p105
      %p204 = pneg %p102
      %p205 = pneg %p131
      %p206 = pneg %p128
      %p207 = scmp.lt.s32.totalorder %s18, 1
      %s208 = scalar_select %p207, %s18, 1
      %s209 = smul.addr %s208, 3
      %s210 = smul.addr %s209, 8
      %s211 = scalar_lea.vmem %s3, %s210
      %s212 = sadd.s32 %s18, %s19
      %p213 = scmp.lt.s32.totalorder %s212, 1
      %s214 = scalar_select %p213, %s212, 1
      %s215 = smul.addr %s214, 8
      %s216 = scalar_lea.vmem %s0, %s215
      %s217 = sadd.s32 %s18, %s19
      %s218 = sadd.s32 %s18, %s19
      %p219 = scmp.lt.s32.totalorder %s218, 1
      %s220 = scalar_select %p219, %s218, 1
      %s221 = smul.addr %s220, 8
      %s222 = scalar_lea.vmem %s1, %s221
      %s223 = sadd.s32 %s18, %s19
      %s224 = sadd.s32 %s18, %s19
      %p225 = scmp.lt.s32.totalorder %s224, 1
      %s226 = scalar_select %p225, %s224, 1
      %s227 = smul.addr %s226, 8
      %s228 = scalar_lea.vmem %s2, %s227
      %s229 = sadd.s32 %s18, %s19
      %p230 = scmp.lt.s32.totalorder %s18, 1
      %s231 = scalar_select %p230, %s18, 1
      %s232 = smul.addr %s231, 3
      %s233 = smul.addr %s232, 8
      %s234 = scalar_lea.vmem %s3, %s233
      %p235 = scmp.eq.s32.totalorder %s19, 0
      // Predicated region
      $region33: #{my_loss.1} parent=31 // pred_check
        %p236 = pneg %p235
      $region34: #{my_loss.1} parent=31 // pred_check_branch
        %238 = sbr.rel (%p236) target = $region36
      $region35: #{my_loss.1} parent=31 // pred_region
        %239 = vst [vmem:[#allocation2] sm:$0xff] 0.0
        %240 = vst [vmem:[#allocation3] sm:$0xff] 0.0
        %241 = vst [vmem:[#allocation4] sm:$0xff] 0.0
      $region36: #{my_loss.1} parent=31 // pred_fallthru
        _
      %v242 = vld [vmem:[%s216] sm:$0xff]
      %v243 = vld [vmem:[%s222] sm:$0xff]
      %v244 = vld [vmem:[%s228] sm:$0xff]
      %vm245 = vcmp.ge.f32.partialorder %v242, %v243
      %vm246 = vcmp.ge.f32.partialorder %v244, %v242
      %vm247 = vmand %vm245, %vm246
      %v248 = vsel %vm247, 1, 0
      %v249 = vcvt.s32.f32 %v248
      %v250 = vsub.f32 %v244, %v243
      %v251 = vmul.f32 %v250, %v249
      %v252 = vsub.f32 %v242, %v243
      %v253 = vmul.f32 %v252, -50.0
      %v254 = vmin.f32 %v253, 40.0
      %v255 = vmul.f32 %v254, 1.442695
      %v256 = vpow.pop %v255
      %v257 = vsub.f32 %v244, %v242
      %v258 = vmul.f32 %v257, -50.0
      %v259 = vmin.f32 %v258, 40.0
      %v260 = vmul.f32 %v259, 1.442695
      %v261 = vpow.pop %v260
      %v262 = vadd.f32 %v256, 1.0
      %v263 = vadd.f32 %v261, 1.0
      %v264 = vmul.f32 %v262, %v263
      %v265 = vrcp.pop %v264
      %v266 = vmul.f32 %v264, %v265
      %v267 = vsub.f32 2.0, %v266
      %v268 = vmul.f32 %v265, %v267
      %v269 = vld [vmem:[#allocation2] sm:$0xff]
      %v270 = vadd.f32 %v249, 0.0
      %v271 = vadd.f32 %v269, %v270
      %272 = vst [vmem:[#allocation2] sm:$0xff] %v271
      %v273 = vld [vmem:[#allocation3] sm:$0xff]
      %v274 = vadd.f32 %v251, 0.0
      %v275 = vadd.f32 %v273, %v274
      %276 = vst [vmem:[#allocation3] sm:$0xff] %v275
      %v277 = vld [vmem:[#allocation4] sm:$0xff]
      %v278 = vadd.f32 %v268, 0.0
      %v279 = vadd.f32 %v277, %v278
      %280 = vst [vmem:[#allocation4] sm:$0xff] %v279
      // Predicated region
      $region37: #{my_loss.1} parent=31 // pred_check
        %p281 = pneg %p235
      $region38: #{my_loss.1} parent=31 // pred_check_branch
        %283 = sbr.rel (%p281) target = $region40
      $region39: #{my_loss.1} parent=31 // pred_region
        %v284 = vld [vmem:[#allocation2] sm:$0xff]
        %285 = vst [vmem:[%s234] sm:$0xff] %v284
        %v286 = vld [vmem:[#allocation3] sm:$0xff]
        %s287 = scalar_lea.vmem %s234, 8
        %288 = vst [vmem:[%s287] sm:$0xff] %v286
        %v289 = vld [vmem:[#allocation4] sm:$0xff]
        %s290 = scalar_lea.vmem %s234, 16
        %291 = vst [vmem:[%s290] sm:$0xff] %v289
      $region40: #{my_loss.1} parent=31 // pred_fallthru
        _
      %p292 = scmp.lt.s32.totalorder %s18, 1
      %s293 = scalar_select %p292, %s18, 1
      %s294 = smul.addr %s293, 3
      %s295 = smul.addr %s294, 8
      %s296 = scalar_lea.vmem %s3, %s295
      // Predicated region
      $region41: #{my_loss.1} parent=31 // pred_check
        %p297 = pneg %p128
      $region42: #{my_loss.1} parent=31 // pred_check_branch
        %299 = sbr.rel (%p297) target = $region44
      $region43: #{my_loss.1} parent=31 // pred_region
        _
      $region44: #{my_loss.1} parent=31 // pred_fallthru
        _
    $region32: #{my_loss.1} parent=5 // pred_fallthru
      _
    %p300 = scmp.le.s32.totalorder 2, %s9
    // Predicated region
    $region45: #{my_loss.1} parent=5 // pred_check
      %p301 = pneg %p300
    $region46: #{my_loss.1} parent=5 // pred_check_branch
      %303 = sbr.rel (%p301) target = $region48
    $region47: #{my_loss.1} parent=5 // pred_region
      %s304 = ssub.s32 %s9, 2
      // Predicated region
      $region49: #{my_loss.1} parent=47 // pred_check
        %p305 = pneg %p134
      $region50: #{my_loss.1} parent=47 // pred_check_branch
        %307 = sbr.rel (%p305) target = $region52
      $region51: #{my_loss.1} parent=47 // pred_region
        %p308 = scmp.lt.s32.totalorder %s20, 1
        %s309 = scalar_select %p308, %s20, 1
        %s310 = smul.addr %s309, 3
        %s311 = smul.addr %s310, 8
        %s312 = scalar_lea.vmem %s3, %s311
      $region52: #{my_loss.1} parent=47 // pred_fallthru
        _
    $region48: #{my_loss.1} parent=5 // pred_fallthru
      _
  $region6: #{my_loss.1} parent=0 // loop_footer
    %s13 = sadd.s32 1, %s9
  $region7: #{my_loss.1} parent=0 // loop_footer_branch
    %8 = sbr.rel target = $region3
  $region8: #{my_loss.1} parent=0 // loop_exit
    _

</llo_original>
